<compile_context>
chip_gen: v7x
topology: tpu7x:2x2x1
jax: 0.10.0
libtpu: 0.0.40
codegen_flags: <defaults>
</compile_context>

<pallas_src>
import functools

import jax
import jax.numpy as jnp
from jax.experimental import pallas as pl
from jax.experimental.pallas import tpu as pltpu

LANE = 128      # vreg lane width (last dim)
SUBLANE = 8     # f32 sublane width (second-to-last dim)


def _round_up(x, m):
    return (x + m - 1) // m * m


def _pad_to(a, shape):
    pads = [(0, t - s) for s, t in zip(a.shape, shape)]
    return jnp.pad(a, pads)


def mlp_kernel(x_ref, w1_ref, b1_ref, w2_ref, b2_ref, w3_ref, b3_ref, o_ref,
               *, approx_recip: bool):
    """One lane-dense batch tile of: out = L3(sigmoid(L2(sigmoid(L1(x)))))."""

    def sigmoid(h):
        # Explicit 1/(1+exp(-h)); exp goes to the EUP.  With approx_recip=True
        # the reciprocal also uses the EUP vrcp slot (off the VALU path) —
        # the right knob once hidden width makes VALU the binding slot.
        return pl.reciprocal(1.0 + jnp.exp(-h), approx=approx_recip)

    x = x_ref[...]
    # layer 1 (+ sigmoid); accumulate in f32 regardless of dot input dtype
    h1 = jnp.dot(x, w1_ref[...], preferred_element_type=jnp.float32) + b1_ref[...]
    h1 = sigmoid(h1).astype(w2_ref.dtype)
    # layer 2 (+ sigmoid)
    h2 = jnp.dot(h1, w2_ref[...], preferred_element_type=jnp.float32) + b2_ref[...]
    h2 = sigmoid(h2).astype(w3_ref.dtype)
    # output layer (no activation); lane-dense full-tile store
    o_ref[...] = (
        jnp.dot(h2, w3_ref[...], preferred_element_type=jnp.float32) + b3_ref[...]
    ).astype(o_ref.dtype)


def net_forward(x, params, *, tile_b=None, dot_dtype=jnp.float32,
                approx_recip=False):
    """x: (B, n_feature) f32.  params: dict from init_params (weights (in,out))."""
    w1, b1 = params["w1"], params["b1"]
    w2, b2 = params["w2"], params["b2"]
    w3, b3 = params["w3"], params["b3"]

    B, F = x.shape
    H = w1.shape[1]
    O = w3.shape[1]

    # ---- lane-dense padding of all feature dims, sublane padding of batch ----
    Fp = _round_up(F, LANE)
    Hp = _round_up(H, LANE)
    Op = _round_up(O, LANE)
    if tile_b is None:
        tile_b = min(512, _round_up(B, SUBLANE))   # 512 ≈ sweet spot per tiling curve
    tile_b = _round_up(tile_b, SUBLANE)
    Bp = _round_up(B, tile_b)

    xp = _pad_to(x, (Bp, Fp)).astype(dot_dtype)
    w1p = _pad_to(w1, (Fp, Hp)).astype(dot_dtype)
    w2p = _pad_to(w2, (Hp, Hp)).astype(dot_dtype)
    w3p = _pad_to(w3, (Hp, Op)).astype(dot_dtype)
    # biases stay f32 (f32 accumulation / activation math even on the bf16 path)
    b1p = _pad_to(b1, (1, Hp)).astype(jnp.float32)
    b2p = _pad_to(b2, (1, Hp)).astype(jnp.float32)
    b3p = _pad_to(b3, (1, Op)).astype(jnp.float32)

    grid = (Bp // tile_b,)
    resident = lambda i: (0, 0)     # weights/biases stay VMEM-resident across tiles

    in_specs = [
        pl.BlockSpec((tile_b, Fp), lambda i: (i, 0)),   # x: batch-tiled
        pl.BlockSpec((Fp, Hp), resident),               # w1
        pl.BlockSpec((1, Hp), resident),                # b1
        pl.BlockSpec((Hp, Hp), resident),               # w2
        pl.BlockSpec((1, Hp), resident),                # b2
        pl.BlockSpec((Hp, Op), resident),               # w3
        pl.BlockSpec((1, Op), resident),                # b3
    ]
    out_specs = pl.BlockSpec((tile_b, Op), lambda i: (i, 0))

    itemsize = jnp.dtype(dot_dtype).itemsize
    cost = pl.CostEstimate(
        flops=2 * Bp * (Fp * Hp + Hp * Hp + Hp * Op),
        transcendentals=2 * Bp * Hp,                    # two sigmoid layers (exp)
        bytes_accessed=(
            itemsize * (Bp * Fp + Fp * Hp + Hp * Hp + Hp * Op)
            + 4 * (2 * Hp + Op)                          # biases (f32)
            + 4 * Bp * Op                                # output (f32)
        ),
    )

    out_padded = pl.pallas_call(
        functools.partial(mlp_kernel, approx_recip=approx_recip),
        grid=grid,
        in_specs=in_specs,
        out_specs=out_specs,
        out_shape=jax.ShapeDtypeStruct((Bp, Op), jnp.float32),
        compiler_params=pltpu.CompilerParams(
            # batch axis is embarrassingly parallel -> shards across v7x's 2 TCs;
            # harmless on single-TC v5e/v6e.
            dimension_semantics=("parallel",),
        ),
        cost_estimate=cost,
    )(xp, w1p, b1p, w2p, b2p, w3p, b3p)

    # Strip batch/lane padding outside the kernel (free layout plumbing).
    return out_padded[:B, :O]


def init_params(key, n_feature, n_hidden, n_output):
    """Deterministic synthetic init (PyTorch-Linear-like uniform ranges)."""
    ks = jax.random.split(key, 6)

    def lin(kw, kb, fan_in, fan_out):
        bound = 1.0 / jnp.sqrt(fan_in)
        # stored as (in, out) — transpose of PyTorch's (out, in) layout
        w = jax.random.uniform(kw, (fan_in, fan_out), jnp.float32, -bound, bound)
        b = jax.random.uniform(kb, (1, fan_out), jnp.float32, -bound, bound)
        return w, b

    w1, b1 = lin(ks[0], ks[1], n_feature, n_hidden)
    w2, b2 = lin(ks[2], ks[3], n_hidden, n_hidden)
    w3, b3 = lin(ks[4], ks[5], n_hidden, n_output)
    return {"w1": w1, "b1": b1, "w2": w2, "b2": b2, "w3": w3, "b3": b3}


if __name__ == "__main__":
    n_feature, n_hidden, n_output = 16, 32, 4
    batch = 8

    key = jax.random.PRNGKey(0)
    kx, kp = jax.random.split(key)

    x = jax.random.normal(kx, (batch, n_feature), jnp.float32)
    params = init_params(kp, n_feature, n_hidden, n_output)

    # Demo uses f32 dot inputs + exact reciprocal so the 1e-5 check holds.
    # For real v6e/v7x workloads: dot_dtype=jnp.bfloat16, approx_recip=True.
    out = net_forward(x, params)
    jax.block_until_ready(out)

    # Pure-JAX reference for sanity check
    ref = jax.nn.sigmoid(x @ params["w1"] + params["b1"])
    ref = jax.nn.sigmoid(ref @ params["w2"] + params["b2"])
    ref = ref @ params["w3"] + params["b3"]

    assert out.shape == (batch, n_output)
    assert jnp.allclose(out, ref, atol=1e-5, rtol=1e-5)

    print("KERNEL_OK")
</pallas_src>

<mosaic_0001>
module attributes {stable_mosaic.version = 11 : i64} {
  func.func @mlp_kernel(%arg0: i32, %arg1: memref<8x128xf32, #tpu.memory_space<vmem>>, %arg2: memref<128x128xf32, #tpu.memory_space<vmem>>, %arg3: memref<1x128xf32, #tpu.memory_space<vmem>>, %arg4: memref<128x128xf32, #tpu.memory_space<vmem>>, %arg5: memref<1x128xf32, #tpu.memory_space<vmem>>, %arg6: memref<128x128xf32, #tpu.memory_space<vmem>>, %arg7: memref<1x128xf32, #tpu.memory_space<vmem>>, %arg8: memref<8x128xf32, #tpu.memory_space<vmem>>) attributes {dimension_semantics = [#tpu.dimension_semantics<parallel>], iteration_bounds = array<i64: 1>, scalar_prefetch = 0 : i64, scratch_operands = 0 : i64, tpu.core_type = #tpu.core_type<tc>, window_params = [{transform_indices = @transform_0, window_bounds = array<i64: 8, 128>}, {pipeline_mode = #tpu.pipeline_mode<synchronous>, transform_indices = @transform_1, window_bounds = array<i64: 128, 128>}, {pipeline_mode = #tpu.pipeline_mode<synchronous>, transform_indices = @transform_2, window_bounds = array<i64: 1, 128>}, {pipeline_mode = #tpu.pipeline_mode<synchronous>, transform_indices = @transform_3, window_bounds = array<i64: 128, 128>}, {pipeline_mode = #tpu.pipeline_mode<synchronous>, transform_indices = @transform_4, window_bounds = array<i64: 1, 128>}, {pipeline_mode = #tpu.pipeline_mode<synchronous>, transform_indices = @transform_5, window_bounds = array<i64: 128, 128>}, {pipeline_mode = #tpu.pipeline_mode<synchronous>, transform_indices = @transform_6, window_bounds = array<i64: 1, 128>}, {transform_indices = @transform_7, window_bounds = array<i64: 8, 128>}]} {
    %c0 = arith.constant 0 : index
    %c0_0 = arith.constant 0 : index
    %0 = vector.load %arg1[%c0, %c0_0] : memref<8x128xf32, #tpu.memory_space<vmem>>, vector<8x128xf32>
    %c0_1 = arith.constant 0 : index
    %c0_2 = arith.constant 0 : index
    %1 = vector.load %arg2[%c0_1, %c0_2] : memref<128x128xf32, #tpu.memory_space<vmem>>, vector<128x128xf32>
    %cst = arith.constant dense<0.000000e+00> : vector<8x128xf32>
    %2 = tpu.matmul %0, %1, %cst {dimension_numbers = #tpu.dot_dimension_numbers<[1], [0], [0], [1], [0, 0, 1, 1], [], []>} : vector<8x128xf32>, vector<128x128xf32>, vector<8x128xf32> -> vector<8x128xf32>
    %c0_3 = arith.constant 0 : index
    %c0_4 = arith.constant 0 : index
    %3 = vector.load %arg3[%c0_3, %c0_4] : memref<1x128xf32, #tpu.memory_space<vmem>>, vector<1x128xf32>
    %4 = vector.broadcast %3 : vector<1x128xf32> to vector<8x128xf32>
    %5 = arith.addf %2, %4 : vector<8x128xf32>
    %cst_5 = arith.constant 0.000000e+00 : f32
    %6 = vector.broadcast %cst_5 : f32 to vector<8x128xf32>
    %7 = arith.subf %6, %5 : vector<8x128xf32>
    %8 = math.exp %7 : vector<8x128xf32>
    %cst_6 = arith.constant 1.000000e+00 : f32
    %9 = vector.broadcast %cst_6 : f32 to vector<8x128xf32>
    %10 = arith.addf %9, %8 : vector<8x128xf32>
    %11 = tpu.reciprocal %10 : vector<8x128xf32> -> vector<8x128xf32>
    %c0_7 = arith.constant 0 : index
    %c0_8 = arith.constant 0 : index
    %12 = vector.load %arg4[%c0_7, %c0_8] : memref<128x128xf32, #tpu.memory_space<vmem>>, vector<128x128xf32>
    %cst_9 = arith.constant dense<0.000000e+00> : vector<8x128xf32>
    %13 = tpu.matmul %11, %12, %cst_9 {dimension_numbers = #tpu.dot_dimension_numbers<[1], [0], [0], [1], [0, 0, 1, 1], [], []>} : vector<8x128xf32>, vector<128x128xf32>, vector<8x128xf32> -> vector<8x128xf32>
    %c0_10 = arith.constant 0 : index
    %c0_11 = arith.constant 0 : index
    %14 = vector.load %arg5[%c0_10, %c0_11] : memref<1x128xf32, #tpu.memory_space<vmem>>, vector<1x128xf32>
    %15 = vector.broadcast %14 : vector<1x128xf32> to vector<8x128xf32>
    %16 = arith.addf %13, %15 : vector<8x128xf32>
    %cst_12 = arith.constant 0.000000e+00 : f32
    %17 = vector.broadcast %cst_12 : f32 to vector<8x128xf32>
    %18 = arith.subf %17, %16 : vector<8x128xf32>
    %19 = math.exp %18 : vector<8x128xf32>
    %cst_13 = arith.constant 1.000000e+00 : f32
    %20 = vector.broadcast %cst_13 : f32 to vector<8x128xf32>
    %21 = arith.addf %20, %19 : vector<8x128xf32>
    %22 = tpu.reciprocal %21 : vector<8x128xf32> -> vector<8x128xf32>
    %c0_14 = arith.constant 0 : index
    %c0_15 = arith.constant 0 : index
    %23 = vector.load %arg6[%c0_14, %c0_15] : memref<128x128xf32, #tpu.memory_space<vmem>>, vector<128x128xf32>
    %cst_16 = arith.constant dense<0.000000e+00> : vector<8x128xf32>
    %24 = tpu.matmul %22, %23, %cst_16 {dimension_numbers = #tpu.dot_dimension_numbers<[1], [0], [0], [1], [0, 0, 1, 1], [], []>} : vector<8x128xf32>, vector<128x128xf32>, vector<8x128xf32> -> vector<8x128xf32>
    %c0_17 = arith.constant 0 : index
    %c0_18 = arith.constant 0 : index
    %25 = vector.load %arg7[%c0_17, %c0_18] : memref<1x128xf32, #tpu.memory_space<vmem>>, vector<1x128xf32>
    %26 = vector.broadcast %25 : vector<1x128xf32> to vector<8x128xf32>
    %27 = arith.addf %24, %26 : vector<8x128xf32>
    %c0_19 = arith.constant 0 : index
    %c0_20 = arith.constant 0 : index
    %28 = vector.load %arg8[%c0_19, %c0_20] : memref<8x128xf32, #tpu.memory_space<vmem>>, vector<8x128xf32>
    tpu.vector_store %arg8[%c0_19, %c0_20], %27 {strides = array<i32>} : memref<8x128xf32, #tpu.memory_space<vmem>>, vector<8x128xf32>,
    return
  }
  func.func @transform_0(%arg0: i32) -> (i32, i32) {
    %c0_i32 = arith.constant 0 : i32
    %c0_i32_0 = arith.constant 0 : i32
    return %arg0, %c0_i32 : i32, i32
  }
  func.func @transform_1(%arg0: i32) -> (i32, i32) {
    %c0_i32 = arith.constant 0 : i32
    %c0_i32_0 = arith.constant 0 : i32
    %c0_i32_1 = arith.constant 0 : i32
    return %c0_i32, %c0_i32_0 : i32, i32
  }
  func.func @transform_2(%arg0: i32) -> (i32, i32) {
    %c0_i32 = arith.constant 0 : i32
    %c0_i32_0 = arith.constant 0 : i32
    %c0_i32_1 = arith.constant 0 : i32
    return %c0_i32, %c0_i32_0 : i32, i32
  }
  func.func @transform_3(%arg0: i32) -> (i32, i32) {
    %c0_i32 = arith.constant 0 : i32
    %c0_i32_0 = arith.constant 0 : i32
    %c0_i32_1 = arith.constant 0 : i32
    return %c0_i32, %c0_i32_0 : i32, i32
  }
  func.func @transform_4(%arg0: i32) -> (i32, i32) {
    %c0_i32 = arith.constant 0 : i32
    %c0_i32_0 = arith.constant 0 : i32
    %c0_i32_1 = arith.constant 0 : i32
    return %c0_i32, %c0_i32_0 : i32, i32
  }
  func.func @transform_5(%arg0: i32) -> (i32, i32) {
    %c0_i32 = arith.constant 0 : i32
    %c0_i32_0 = arith.constant 0 : i32
    %c0_i32_1 = arith.constant 0 : i32
    return %c0_i32, %c0_i32_0 : i32, i32
  }
  func.func @transform_6(%arg0: i32) -> (i32, i32) {
    %c0_i32 = arith.constant 0 : i32
    %c0_i32_0 = arith.constant 0 : i32
    %c0_i32_1 = arith.constant 0 : i32
    return %c0_i32, %c0_i32_0 : i32, i32
  }
  func.func @transform_7(%arg0: i32) -> (i32, i32) {
    %c0_i32 = arith.constant 0 : i32
    %c0_i32_0 = arith.constant 0 : i32
    return %arg0, %c0_i32 : i32, i32
  }
}

</mosaic_0001>

<llo_original>
// kernel: tpu_custom_call.1
$region0: #{tpu_custom_call.1}
  #allocation0 [shape = 'u32[]', space=smem, size = 0x4, offset = 0x4, fixed_abs, tag = 'smem constant byte address 0x4 - core index']
  #allocation1 [shape = 'u32[144,128]{1,0:T(1,128)}', space=vmem, size = 0x12000, scoped, tag = 'internal scratch']
  %s0 = inlined_call_operand.hbm [shape: f32[8,128], index: 0, kind: input, shape index: {}]
  %s1 = inlined_call_operand.hbm [shape: f32[128,128], index: 1, kind: input, shape index: {}]
  %s2 = inlined_call_operand.vmem [shape: f32[1,128], index: 2, kind: input, shape index: {}]
  %s3 = inlined_call_operand.hbm [shape: f32[128,128], index: 3, kind: input, shape index: {}]
  %s4 = inlined_call_operand.vmem [shape: f32[1,128], index: 4, kind: input, shape index: {}]
  %s5 = inlined_call_operand.hbm [shape: f32[128,128], index: 5, kind: input, shape index: {}]
  %s6 = inlined_call_operand.vmem [shape: f32[1,128], index: 6, kind: input, shape index: {}]
  %s7 = inlined_call_operand.hbm [shape: f32[8,128], index: 7, kind: output, shape index: {}]
  %s8 = sld [smem:[#allocation0]]
  $region54: #{tpu_custom_call.1} parent=0
    _
  %s10 = ssub.s32 1, %s8
  %s11 = scalar_select 0, %s10, %s8
  $region1: #{tpu_custom_call.1} parent=0
    #allocation2 [shape = 'u8[4096]{0}', space=vmem, size = 0x1000, scoped, tag = 'input window, operand 0, single buffered']
    #allocation3 [shape = 's32[1]{0}', space=sflag, size = 0x4, scoped, tag = 'scoped memory for tpu_custom_call.1']
    #allocation4 [shape = 's32[1]{0}', space=sflag, size = 0x4, scoped, tag = 'scoped memory for tpu_custom_call.1']
    #allocation5 [shape = 'u8[65536]{0}', space=vmem, size = 0x10000, scoped, tag = 'input window, operand 1, single buffered']
    #allocation6 [shape = 's32[1]{0}', space=sflag, size = 0x4, scoped, tag = 'scoped memory for tpu_custom_call.1']
    #allocation7 [shape = 'u8[65536]{0}', space=vmem, size = 0x10000, scoped, tag = 'input window, operand 3, single buffered']
    #allocation8 [shape = 'u8[65536]{0}', space=vmem, size = 0x10000, scoped, tag = 'input window, operand 5, single buffered']
    #allocation9 [shape = 's32[1]{0}', space=sflag, size = 0x4, scoped, tag = 'scoped memory for tpu_custom_call.1']
    #allocation10 [shape = 'u8[4096]{0}', space=vmem, size = 0x1000, scoped, tag = 'output window, operand 0, single buffered']
    %12 = vsyncpa [#allocation3], 0
    %13 = vsyncpa [#allocation6], 0
    %14 = vsyncpa [#allocation9], 0
    %15 = vsyncpa [#allocation4], 0
    // Predicated region
    $region2: #{tpu_custom_call.1} parent=1 // pred_check
      _
    $region3: #{tpu_custom_call.1} parent=1 // pred_check_branch
      %17 = sbr.rel (0) target = $region5
    $region4: #{tpu_custom_call.1} parent=1 // pred_region
      %s19 = ssub.s32 128, 128
      %20 = vsyncadd [#allocation3], %s19
      %s22 = sshll.u32 [#allocation2], 4
      %s23 = int_to_ptr.vmem [resolvable:$true] %s22
      %25 = dma.hbm_to_vmem [thread:$0]  %s0, 128, %s23, [#allocation3]
    $region5: #{tpu_custom_call.1} parent=1 // pred_fallthru
      _
    // Predicated region
    $region6: #{tpu_custom_call.1} parent=1 // pred_check
      _
    $region7: #{tpu_custom_call.1} parent=1 // pred_check_branch
      %27 = sbr.rel (0) target = $region9
    $region8: #{tpu_custom_call.1} parent=1 // pred_region
      %s29 = ssub.s32 2048, 2048
      %30 = vsyncadd [#allocation6], %s29
      %s31 = sshll.u32 [#allocation5], 4
      %s32 = int_to_ptr.vmem [resolvable:$true] %s31
      %37 = dma.hbm_to_vmem [thread:$0]  %s1, 2048, %s32, [#allocation6], 128, 128, 8
    $region9: #{tpu_custom_call.1} parent=1 // pred_fallthru
      _
    // Predicated region
    $region10: #{tpu_custom_call.1} parent=1 // pred_check
      _
    $region11: #{tpu_custom_call.1} parent=1 // pred_check_branch
      %39 = sbr.rel (0) target = $region13
    $region12: #{tpu_custom_call.1} parent=1 // pred_region
      _
    $region13: #{tpu_custom_call.1} parent=1 // pred_fallthru
      _
    // Predicated region
    $region14: #{tpu_custom_call.1} parent=1 // pred_check
      _
    $region15: #{tpu_custom_call.1} parent=1 // pred_check_branch
      %41 = sbr.rel (0) target = $region17
    $region16: #{tpu_custom_call.1} parent=1 // pred_region
      %s43 = ssub.s32 2048, 2048
      %44 = vsyncadd [#allocation6], %s43
      %s45 = sshll.u32 [#allocation7], 4
      %s46 = int_to_ptr.vmem [resolvable:$true] %s45
      %51 = dma.hbm_to_vmem [thread:$0]  %s3, 2048, %s46, [#allocation6], 128, 128, 8
    $region17: #{tpu_custom_call.1} parent=1 // pred_fallthru
      _
    // Predicated region
    $region18: #{tpu_custom_call.1} parent=1 // pred_check
      _
    $region19: #{tpu_custom_call.1} parent=1 // pred_check_branch
      %53 = sbr.rel (0) target = $region21
    $region20: #{tpu_custom_call.1} parent=1 // pred_region
      _
    $region21: #{tpu_custom_call.1} parent=1 // pred_fallthru
      _
    // Predicated region
    $region22: #{tpu_custom_call.1} parent=1 // pred_check
      _
    $region23: #{tpu_custom_call.1} parent=1 // pred_check_branch
      %55 = sbr.rel (0) target = $region25
    $region24: #{tpu_custom_call.1} parent=1 // pred_region
      %s57 = ssub.s32 2048, 2048
      %58 = vsyncadd [#allocation9], %s57
      %s59 = sshll.u32 [#allocation8], 4
      %s60 = int_to_ptr.vmem [resolvable:$true] %s59
      %65 = dma.hbm_to_vmem [thread:$0]  %s5, 2048, %s60, [#allocation9], 128, 128, 8
    $region25: #{tpu_custom_call.1} parent=1 // pred_fallthru
      _
    // Predicated region
    $region26: #{tpu_custom_call.1} parent=1 // pred_check
      _
    $region27: #{tpu_custom_call.1} parent=1 // pred_check_branch
      %67 = sbr.rel (0) target = $region29
    $region28: #{tpu_custom_call.1} parent=1 // pred_region
      _
    $region29: #{tpu_custom_call.1} parent=1 // pred_fallthru
      _
    // Predicated region
    $region30: #{tpu_custom_call.1} parent=1 // pred_check
      _
    $region31: #{tpu_custom_call.1} parent=1 // pred_check_branch
      %69 = sbr.rel (0) target = $region33
    $region32: #{tpu_custom_call.1} parent=1 // pred_region
      %70 = dma.done [#allocation3], 128
    $region33: #{tpu_custom_call.1} parent=1 // pred_fallthru
      _
    // Predicated region
    $region34: #{tpu_custom_call.1} parent=1 // pred_check
      _
    $region35: #{tpu_custom_call.1} parent=1 // pred_check_branch
      %72 = sbr.rel (0) target = $region37
    $region36: #{tpu_custom_call.1} parent=1 // pred_region
      %73 = dma.done [#allocation6], 2048
    $region37: #{tpu_custom_call.1} parent=1 // pred_fallthru
      _
    // Predicated region
    $region38: #{tpu_custom_call.1} parent=1 // pred_check
      _
    $region39: #{tpu_custom_call.1} parent=1 // pred_check_branch
      %75 = sbr.rel (0) target = $region41
    $region40: #{tpu_custom_call.1} parent=1 // pred_region
      %76 = dma.done [#allocation6], 2048
    $region41: #{tpu_custom_call.1} parent=1 // pred_fallthru
      _
    // Predicated region
    $region42: #{tpu_custom_call.1} parent=1 // pred_check
      _
    $region43: #{tpu_custom_call.1} parent=1 // pred_check_branch
      %78 = sbr.rel (0) target = $region45
    $region44: #{tpu_custom_call.1} parent=1 // pred_region
      %79 = dma.done [#allocation9], 2048
    $region45: #{tpu_custom_call.1} parent=1 // pred_fallthru
      _
    %v80 = vld [vmem:[#allocation2] sm:$0xff]
    %v81 = vld [vmem:[#allocation5] sm:$0xff]
    %v82 = vld [vmem:[#allocation5 + $0x8] sm:$0xff]
    %v83 = vld [vmem:[#allocation5 + $0x10] sm:$0xff]
    %v84 = vld [vmem:[#allocation5 + $0x18] sm:$0xff]
    %v85 = vld [vmem:[#allocation5 + $0x20] sm:$0xff]
    %v86 = vld [vmem:[#allocation5 + $0x28] sm:$0xff]
    %v87 = vld [vmem:[#allocation5 + $0x30] sm:$0xff]
    %v88 = vld [vmem:[#allocation5 + $0x38] sm:$0xff]
    %v89 = vld [vmem:[#allocation5 + $0x40] sm:$0xff]
    %v90 = vld [vmem:[#allocation5 + $0x48] sm:$0xff]
    %v91 = vld [vmem:[#allocation5 + $0x50] sm:$0xff]
    %v92 = vld [vmem:[#allocation5 + $0x58] sm:$0xff]
    %v93 = vld [vmem:[#allocation5 + $0x60] sm:$0xff]
    %v94 = vld [vmem:[#allocation5 + $0x68] sm:$0xff]
    %v95 = vld [vmem:[#allocation5 + $0x70] sm:$0xff]
    %v96 = vld [vmem:[#allocation5 + $0x78] sm:$0xff]
    %v97 = vld [vmem:[%s2] sm:$0x1]
    %v99 = vlaneseq
    %v100 = vshrl.u32 %v99, 7
    %v101 = vsub.s32 0, %v100
    %v102 = vrot.slane %v97, %v101
    %104 = vmatprep.subr.mxu0 0.0
    %105 = vmatpush1.msra.mxu0 %v81
    %106 = vmatprep.subr.mxu0 0.0
    %107 = vmatpush1.msra.mxu0 %v82
    %108 = vmatprep.subr.mxu0 0.0
    %109 = vmatpush1.msra.mxu0 %v83
    %110 = vmatprep.subr.mxu0 0.0
    %111 = vmatpush1.msra.mxu0 %v84
    %112 = vmatprep.subr.mxu0 0.0
    %113 = vmatpush1.msra.mxu0 %v85
    %114 = vmatprep.subr.mxu0 0.0
    %115 = vmatpush1.msra.mxu0 %v86
    %116 = vmatprep.subr.mxu0 0.0
    %117 = vmatpush1.msra.mxu0 %v87
    %118 = vmatprep.subr.mxu0 0.0
    %119 = vmatpush1.msra.mxu0 %v88
    %120 = vmatprep.subr.mxu0 0.0
    %121 = vmatpush1.msra.mxu0 %v89
    %122 = vmatprep.subr.mxu0 0.0
    %123 = vmatpush1.msra.mxu0 %v90
    %124 = vmatprep.subr.mxu0 0.0
    %125 = vmatpush1.msra.mxu0 %v91
    %126 = vmatprep.subr.mxu0 0.0
    %127 = vmatpush1.msra.mxu0 %v92
    %128 = vmatprep.subr.mxu0 0.0
    %129 = vmatpush1.msra.mxu0 %v93
    %130 = vmatprep.subr.mxu0 0.0
    %131 = vmatpush1.msra.mxu0 %v94
    %132 = vmatprep.subr.mxu0 0.0
    %133 = vmatpush1.msra.mxu0 %v95
    %134 = vmatprep.subr.mxu0 0.0
    %135 = vmatpush1.msra.mxu0 %v96
    %136 = vmatprep.subr.mxu0 0.0
    %137 = vmatpush1.msra.mxu0 0.0
    %138 = vmatprep.subr.mxu0 0.0
    %139 = vmatpush1.msra.mxu0 0.0
    %140 = vmatprep.subr.mxu0 0.0
    %141 = vmatpush1.msra.mxu0 0.0
    %142 = vmatprep.subr.mxu0 0.0
    %143 = vmatpush1.msra.mxu0 0.0
    %144 = vmatprep.subr.mxu0 0.0
    %145 = vmatpush1.msra.mxu0 0.0
    %146 = vmatprep.subr.mxu0 0.0
    %147 = vmatpush1.msra.mxu0 0.0
    %148 = vmatprep.subr.mxu0 0.0
    %149 = vmatpush1.msra.mxu0 0.0
    %150 = vmatprep.subr.mxu0 0.0
    %151 = vmatpush1.msra.mxu0 0.0
    %152 = vmatprep.subr.mxu0 0.0
    %153 = vmatpush1.msra.mxu0 0.0
    %154 = vmatprep.subr.mxu0 0.0
    %155 = vmatpush1.msra.mxu0 0.0
    %156 = vmatprep.subr.mxu0 0.0
    %157 = vmatpush1.msra.mxu0 0.0
    %158 = vmatprep.subr.mxu0 0.0
    %159 = vmatpush1.msra.mxu0 0.0
    %160 = vmatprep.subr.mxu0 0.0
    %161 = vmatpush1.msra.mxu0 0.0
    %162 = vmatprep.subr.mxu0 0.0
    %163 = vmatpush1.msra.mxu0 0.0
    %164 = vmatprep.subr.mxu0 0.0
    %165 = vmatpush1.msra.mxu0 0.0
    %166 = vmatprep.subr.mxu0 0.0
    %167 = vmatpush1.msra.mxu0 0.0
    %168 = vmatprep.mubr.f32.mxu0 0.0
    %169 = vmatmul.mubr.f32.gmra.mrb[0].mxu0 %v80
    %v170 = vpop.f32.mrb[0].mxu0
    %v171 = vadd.f32 %v102, %v170
    %v172 = vpop.f32.mrb[0].mxu0
    %173 = vdwg.mxu0
    %v174 = vsub.f32 0.0, %v171
    %v175 = vmul.f32 %v174, 1.442695
    %v176 = vpow.pop %v175
    %v177 = vadd.f32 %v176, 1.0
    %v178 = vrcp.pop %v177
    %v179 = vld [vmem:[#allocation7] sm:$0xff]
    %v180 = vld [vmem:[#allocation7 + $0x8] sm:$0xff]
    %v181 = vld [vmem:[#allocation7 + $0x10] sm:$0xff]
    %v182 = vld [vmem:[#allocation7 + $0x18] sm:$0xff]
    %v183 = vld [vmem:[#allocation7 + $0x20] sm:$0xff]
    %v184 = vld [vmem:[#allocation7 + $0x28] sm:$0xff]
    %v185 = vld [vmem:[#allocation7 + $0x30] sm:$0xff]
    %v186 = vld [vmem:[#allocation7 + $0x38] sm:$0xff]
    %v187 = vld [vmem:[#allocation7 + $0x40] sm:$0xff]
    %v188 = vld [vmem:[#allocation7 + $0x48] sm:$0xff]
    %v189 = vld [vmem:[#allocation7 + $0x50] sm:$0xff]
    %v190 = vld [vmem:[#allocation7 + $0x58] sm:$0xff]
    %v191 = vld [vmem:[#allocation7 + $0x60] sm:$0xff]
    %v192 = vld [vmem:[#allocation7 + $0x68] sm:$0xff]
    %v193 = vld [vmem:[#allocation7 + $0x70] sm:$0xff]
    %v194 = vld [vmem:[#allocation7 + $0x78] sm:$0xff]
    %v195 = vld [vmem:[%s4] sm:$0x1]
    %v197 = vlaneseq
    %v198 = vshrl.u32 %v197, 7
    %v199 = vsub.s32 0, %v198
    %v200 = vrot.slane %v195, %v199
    %202 = vmatprep.subr.mxu0 0.0
    %203 = vmatpush1.msra.mxu0 %v179
    %204 = vmatprep.subr.mxu0 0.0
    %205 = vmatpush1.msra.mxu0 %v180
    %206 = vmatprep.subr.mxu0 0.0
    %207 = vmatpush1.msra.mxu0 %v181
    %208 = vmatprep.subr.mxu0 0.0
    %209 = vmatpush1.msra.mxu0 %v182
    %210 = vmatprep.subr.mxu0 0.0
    %211 = vmatpush1.msra.mxu0 %v183
    %212 = vmatprep.subr.mxu0 0.0
    %213 = vmatpush1.msra.mxu0 %v184
    %214 = vmatprep.subr.mxu0 0.0
    %215 = vmatpush1.msra.mxu0 %v185
    %216 = vmatprep.subr.mxu0 0.0
    %217 = vmatpush1.msra.mxu0 %v186
    %218 = vmatprep.subr.mxu0 0.0
    %219 = vmatpush1.msra.mxu0 %v187
    %220 = vmatprep.subr.mxu0 0.0
    %221 = vmatpush1.msra.mxu0 %v188
    %222 = vmatprep.subr.mxu0 0.0
    %223 = vmatpush1.msra.mxu0 %v189
    %224 = vmatprep.subr.mxu0 0.0
    %225 = vmatpush1.msra.mxu0 %v190
    %226 = vmatprep.subr.mxu0 0.0
    %227 = vmatpush1.msra.mxu0 %v191
    %228 = vmatprep.subr.mxu0 0.0
    %229 = vmatpush1.msra.mxu0 %v192
    %230 = vmatprep.subr.mxu0 0.0
    %231 = vmatpush1.msra.mxu0 %v193
    %232 = vmatprep.subr.mxu0 0.0
    %233 = vmatpush1.msra.mxu0 %v194
    %234 = vmatprep.subr.mxu0 0.0
    %235 = vmatpush1.msra.mxu0 0.0
    %236 = vmatprep.subr.mxu0 0.0
    %237 = vmatpush1.msra.mxu0 0.0
    %238 = vmatprep.subr.mxu0 0.0
    %239 = vmatpush1.msra.mxu0 0.0
    %240 = vmatprep.subr.mxu0 0.0
    %241 = vmatpush1.msra.mxu0 0.0
    %242 = vmatprep.subr.mxu0 0.0
    %243 = vmatpush1.msra.mxu0 0.0
    %244 = vmatprep.subr.mxu0 0.0
    %245 = vmatpush1.msra.mxu0 0.0
    %246 = vmatprep.subr.mxu0 0.0
    %247 = vmatpush1.msra.mxu0 0.0
    %248 = vmatprep.subr.mxu0 0.0
    %249 = vmatpush1.msra.mxu0 0.0
    %250 = vmatprep.subr.mxu0 0.0
    %251 = vmatpush1.msra.mxu0 0.0
    %252 = vmatprep.subr.mxu0 0.0
    %253 = vmatpush1.msra.mxu0 0.0
    %254 = vmatprep.subr.mxu0 0.0
    %255 = vmatpush1.msra.mxu0 0.0
    %256 = vmatprep.subr.mxu0 0.0
    %257 = vmatpush1.msra.mxu0 0.0
    %258 = vmatprep.subr.mxu0 0.0
    %259 = vmatpush1.msra.mxu0 0.0
    %260 = vmatprep.subr.mxu0 0.0
    %261 = vmatpush1.msra.mxu0 0.0
    %262 = vmatprep.subr.mxu0 0.0
    %263 = vmatpush1.msra.mxu0 0.0
    %264 = vmatprep.subr.mxu0 0.0
    %265 = vmatpush1.msra.mxu0 0.0
    %266 = vmatprep.mubr.f32.mxu0 0.0
    %267 = vmatmul.mubr.f32.gmra.mrb[0].mxu0 %v178
    %v268 = vpop.f32.mrb[0].mxu0
    %v269 = vadd.f32 %v200, %v268
    %v270 = vpop.f32.mrb[0].mxu0
    %271 = vdwg.mxu0
    %v272 = vsub.f32 0.0, %v269
    %v273 = vmul.f32 %v272, 1.442695
    %v274 = vpow.pop %v273
    %v275 = vadd.f32 %v274, 1.0
    %v276 = vrcp.pop %v275
    %v277 = vld [vmem:[#allocation8] sm:$0xff]
    %v278 = vld [vmem:[#allocation8 + $0x8] sm:$0xff]
    %v279 = vld [vmem:[#allocation8 + $0x10] sm:$0xff]
    %v280 = vld [vmem:[#allocation8 + $0x18] sm:$0xff]
    %v281 = vld [vmem:[#allocation8 + $0x20] sm:$0xff]
    %v282 = vld [vmem:[#allocation8 + $0x28] sm:$0xff]
    %v283 = vld [vmem:[#allocation8 + $0x30] sm:$0xff]
    %v284 = vld [vmem:[#allocation8 + $0x38] sm:$0xff]
    %v285 = vld [vmem:[#allocation8 + $0x40] sm:$0xff]
    %v286 = vld [vmem:[#allocation8 + $0x48] sm:$0xff]
    %v287 = vld [vmem:[#allocation8 + $0x50] sm:$0xff]
    %v288 = vld [vmem:[#allocation8 + $0x58] sm:$0xff]
    %v289 = vld [vmem:[#allocation8 + $0x60] sm:$0xff]
    %v290 = vld [vmem:[#allocation8 + $0x68] sm:$0xff]
    %v291 = vld [vmem:[#allocation8 + $0x70] sm:$0xff]
    %v292 = vld [vmem:[#allocation8 + $0x78] sm:$0xff]
    %v293 = vld [vmem:[%s6] sm:$0x1]
    %v295 = vlaneseq
    %v296 = vshrl.u32 %v295, 7
    %v297 = vsub.s32 0, %v296
    %v298 = vrot.slane %v293, %v297
    %300 = vmatprep.subr.mxu0 0.0
    %301 = vmatpush1.msra.mxu0 %v277
    %302 = vmatprep.subr.mxu0 0.0
    %303 = vmatpush1.msra.mxu0 %v278
    %304 = vmatprep.subr.mxu0 0.0
    %305 = vmatpush1.msra.mxu0 %v279
    %306 = vmatprep.subr.mxu0 0.0
    %307 = vmatpush1.msra.mxu0 %v280
    %308 = vmatprep.subr.mxu0 0.0
    %309 = vmatpush1.msra.mxu0 %v281
    %310 = vmatprep.subr.mxu0 0.0
    %311 = vmatpush1.msra.mxu0 %v282
    %312 = vmatprep.subr.mxu0 0.0
    %313 = vmatpush1.msra.mxu0 %v283
    %314 = vmatprep.subr.mxu0 0.0
    %315 = vmatpush1.msra.mxu0 %v284
    %316 = vmatprep.subr.mxu0 0.0
    %317 = vmatpush1.msra.mxu0 %v285
    %318 = vmatprep.subr.mxu0 0.0
    %319 = vmatpush1.msra.mxu0 %v286
    %320 = vmatprep.subr.mxu0 0.0
    %321 = vmatpush1.msra.mxu0 %v287
    %322 = vmatprep.subr.mxu0 0.0
    %323 = vmatpush1.msra.mxu0 %v288
    %324 = vmatprep.subr.mxu0 0.0
    %325 = vmatpush1.msra.mxu0 %v289
    %326 = vmatprep.subr.mxu0 0.0
    %327 = vmatpush1.msra.mxu0 %v290
    %328 = vmatprep.subr.mxu0 0.0
    %329 = vmatpush1.msra.mxu0 %v291
    %330 = vmatprep.subr.mxu0 0.0
    %331 = vmatpush1.msra.mxu0 %v292
    %332 = vmatprep.subr.mxu0 0.0
    %333 = vmatpush1.msra.mxu0 0.0
    %334 = vmatprep.subr.mxu0 0.0
    %335 = vmatpush1.msra.mxu0 0.0
    %336 = vmatprep.subr.mxu0 0.0
    %337 = vmatpush1.msra.mxu0 0.0
    %338 = vmatprep.subr.mxu0 0.0
    %339 = vmatpush1.msra.mxu0 0.0
    %340 = vmatprep.subr.mxu0 0.0
    %341 = vmatpush1.msra.mxu0 0.0
    %342 = vmatprep.subr.mxu0 0.0
    %343 = vmatpush1.msra.mxu0 0.0
    %344 = vmatprep.subr.mxu0 0.0
    %345 = vmatpush1.msra.mxu0 0.0
    %346 = vmatprep.subr.mxu0 0.0
    %347 = vmatpush1.msra.mxu0 0.0
    %348 = vmatprep.subr.mxu0 0.0
    %349 = vmatpush1.msra.mxu0 0.0
    %350 = vmatprep.subr.mxu0 0.0
    %351 = vmatpush1.msra.mxu0 0.0
    %352 = vmatprep.subr.mxu0 0.0
    %353 = vmatpush1.msra.mxu0 0.0
    %354 = vmatprep.subr.mxu0 0.0
    %355 = vmatpush1.msra.mxu0 0.0
    %356 = vmatprep.subr.mxu0 0.0
    %357 = vmatpush1.msra.mxu0 0.0
    %358 = vmatprep.subr.mxu0 0.0
    %359 = vmatpush1.msra.mxu0 0.0
    %360 = vmatprep.subr.mxu0 0.0
    %361 = vmatpush1.msra.mxu0 0.0
    %362 = vmatprep.subr.mxu0 0.0
    %363 = vmatpush1.msra.mxu0 0.0
    %364 = vmatprep.mubr.f32.mxu0 0.0
    %365 = vmatmul.mubr.f32.gmra.mrb[0].mxu0 %v276
    %v366 = vpop.f32.mrb[0].mxu0
    %v367 = vadd.f32 %v298, %v366
    %v368 = vpop.f32.mrb[0].mxu0
    %369 = vdwg.mxu0
    %370 = vst [vmem:[#allocation10] sm:$0xff] %v367
    // Predicated region
    $region46: #{tpu_custom_call.1} parent=1 // pred_check
      _
    $region47: #{tpu_custom_call.1} parent=1 // pred_check_branch
      %372 = sbr.rel (0) target = $region49
    $region48: #{tpu_custom_call.1} parent=1 // pred_region
      %s374 = ssub.s32 128, 128
      %375 = vsyncadd [#allocation4], %s374
      %s377 = sshll.u32 [#allocation10], 4
      %s378 = int_to_ptr.vmem [resolvable:$true] %s377
      %380 = dma.vmem_to_hbm [thread:$0]  %s378, 128, %s7, [#allocation4]
    $region49: #{tpu_custom_call.1} parent=1 // pred_fallthru
      _
    // Predicated region
    $region50: #{tpu_custom_call.1} parent=1 // pred_check
      _
    $region51: #{tpu_custom_call.1} parent=1 // pred_check_branch
      %382 = sbr.rel (0) target = $region53
    $region52: #{tpu_custom_call.1} parent=1 // pred_region
      %383 = dma.done [#allocation4], 128
    $region53: #{tpu_custom_call.1} parent=1 // pred_fallthru
      _
    %384 = vsyncpa [#allocation3], 1
    %385 = vsyncpa [#allocation6], 1
    %386 = vsyncpa [#allocation9], 1
    %387 = vsyncpa [#allocation4], 1

</llo_original>
